<compile_context>
chip_gen: v7x
topology: tpu7x:2x2x1
jax: 0.10.0
libtpu: 0.0.40
codegen_flags: <defaults>
</compile_context>

<pallas_src>
import jax
import jax.numpy as jnp
import numpy as np
from jax.experimental import pallas as pl
from jax.experimental.pallas import tpu as pltpu


def _se_kernel(x_ref, w1e_ref, b1_ref, w2e_ref, b2e_ref, o_ref):
    """Fused SE forward on one (Bt, C*L) lane-dense block.

    x_ref  : (Bt, C*L) activations, flat channel-major (index = c*L + l)
    w1e_ref: (H, C*L)  FC1 weights repeated L times along lanes, pre-scaled by
                       1/L (adaptive-avg-pool folded in)
    b1_ref : (1, H)
    w2e_ref: (H, C*L)  FC2 weights (transposed) repeated L times along lanes
    b2e_ref: (1, C*L)  FC2 bias repeated L times along lanes
    o_ref  : (Bt, C*L)
    """
    x = x_ref[...]                                   # native dtype, read once
    H = w1e_ref.shape[0]

    # z[b, c*L+l] = b2[c] + sum_j relu(pooled @ W1^T + b1)[b, j] * W2[c, j]
    z = b2e_ref[...].astype(jnp.float32)             # (1, C*L)
    for j in range(H):                                # H = channel//reduction (tiny, static)
        # FC1 row j with the 1/L mean-pool folded into the weights:
        #   p_j[b] = sum_{c,l} x[b, c*L+l] * W1[j, c] / L
        pj = jnp.sum(x.astype(jnp.float32) * w1e_ref[j:j + 1, :],
                     axis=-1, keepdims=True)          # (Bt, 1)   XLU lane reduce
        hj = jnp.maximum(pj + b1_ref[:, j:j + 1], 0.0)            # (Bt, 1)  ReLU
        z = z + hj * w2e_ref[j:j + 1, :]                          # (Bt, C*L)

    s = jax.nn.sigmoid(z)                             # (Bt, C*L) f32 (EUP exp)

    # multiply=True: out = x * scale, native-dtype multiply, lane-dense store.
    o_ref[...] = (x * s.astype(x.dtype)).astype(o_ref.dtype)


def _tpu_generation():
    """(generation, tensorcores_per_chip) from the device-kind string."""
    try:
        kind = jax.devices()[0].device_kind.lower()
    except Exception:
        kind = ""
    if "v5 lite" in kind or "v5lite" in kind or "v5e" in kind:
        return "v5e", 1
    if "v6" in kind:
        return "v6e", 1
    if "v7" in kind or "tpu7" in kind or "7x" in kind:
        return "v7x", 2
    return "unknown", 1


# Conservative budgets (bytes) under each generation's *default* scoped-VMEM
# limit (v5e: 16 MiB, v6e: 32 MiB, v7x: 32 MiB of 64 MiB physical) so no
# vmem_limit_bytes override is needed and there is headroom for weights,
# fp32 temporaries and compiler scratch.
_VMEM_BUDGET = {
    "v5e": 12 * 1024 * 1024,
    "v6e": 24 * 1024 * 1024,
    "v7x": 20 * 1024 * 1024,
    "unknown": 12 * 1024 * 1024,
}


def _pick_batch_tile(B, CL, H, itemsize):
    gen, n_cores = _tpu_generation()
    budget = _VMEM_BUDGET.get(gen, _VMEM_BUDGET["unknown"])

    def footprint(bt):
        blk = bt * CL
        io = 2 * 2 * blk * itemsize           # in + out blocks, double-buffered
        f32_tmps = 3 * blk * 4                # transient f32 products / scale
        consts = 2 * (2 * H + 1) * CL * 4     # expanded weights/biases (x2 bufs)
        return io + f32_tmps + consts

    divisors = [d for d in range(1, B + 1) if B % d == 0]
    # Block second-minor dim must be a multiple of 8 or the full batch.
    cands = [d for d in divisors
             if (d == B or d % 8 == 0) and footprint(d) <= budget]
    if not cands:
        # TODO(synk): no C/L tiling path — if even a single batch row exceeds
        # the VMEM budget this needs a two-pass (reduce, then scale) kernel.
        cands = [1]
    bt = max(cands)                            # single-TC chips: fewest steps

    if n_cores >= 2:
        # v7x megacore: prefer an even number of grid steps so both
        # TensorCores get work, but only when each step still moves enough
        # bytes (>= ~512 KiB in+out) to amortise the ~0.35 us per-step cost.
        split = [d for d in cands
                 if (B // d) >= 2 and (B // d) % 2 == 0
                 and 2 * d * CL * itemsize >= 512 * 1024]
        if split:
            bt = max(split)
    return bt


def se_layer(x, w1, b1, w2, b2):
    """SELayer forward (multiply=True).

    x : (B, C, L)   activations, PyTorch NCL convention (kept — no transpose)
    w1: (H, C), b1: (H,)   Linear(channel -> channel // reduction)
    w2: (C, H), b2: (C,)   Linear(channel // reduction -> channel)
    returns (B, C, L)
    """
    B, C, L = x.shape
    H = w1.shape[0]
    CL = C * L

    # Free view: x is contiguous as (B, C, L), so this is a bitcast, not a copy.
    x_flat = x.reshape(B, CL)

    # Lane-expanded parameters (tiny: (2H+1)*C*L + H floats, ~40 KiB here).
    w1e = jnp.repeat(w1, L, axis=1) * (1.0 / L)      # (H, C*L): W1[j,c]/L at c*L+l
    w2e = jnp.repeat(w2.T, L, axis=1)                # (H, C*L): W2[c,j]   at c*L+l
    b2e = jnp.repeat(b2, L).reshape(1, CL)           # (1, C*L): b2[c]     at c*L+l
    b1r = b1.reshape(1, H)

    Bt = _pick_batch_tile(B, CL, H, x.dtype.itemsize)
    grid = (B // Bt,)

    out_flat = pl.pallas_call(
        _se_kernel,
        out_shape=jax.ShapeDtypeStruct((B, CL), x.dtype),
        grid_spec=pltpu.PrefetchScalarGridSpec(
            num_scalar_prefetch=0,
            grid=grid,
            in_specs=[
                pl.BlockSpec((Bt, CL), lambda i: (i, 0)),   # x tile (lane-dense)
                pl.BlockSpec((H, CL), lambda i: (0, 0)),    # W1 expanded (resident)
                pl.BlockSpec((1, H), lambda i: (0, 0)),     # b1
                pl.BlockSpec((H, CL), lambda i: (0, 0)),    # W2^T expanded (resident)
                pl.BlockSpec((1, CL), lambda i: (0, 0)),    # b2 expanded
            ],
            out_specs=pl.BlockSpec((Bt, CL), lambda i: (i, 0)),
        ),
        compiler_params=pltpu.CompilerParams(
            dimension_semantics=("parallel",)),
    )(x_flat, w1e, b1r, w2e, b2e)

    return out_flat.reshape(B, C, L)                 # free view back to NCL


def se_layer_reference(x, w1, b1, w2, b2):
    pooled = jnp.mean(x, axis=2)                     # (B, C)
    h = jnp.maximum(pooled @ w1.T + b1, 0.0)         # (B, H)
    s = jax.nn.sigmoid(h @ w2.T + b2)                # (B, C)
    return x * s[:, :, None]


if __name__ == "__main__":
    # Module config: channel=128, reduction=64  ->  hidden H = 128 // 64 = 2
    B, C, L = 8, 128, 16
    reduction = 64
    H = C // reduction

    key = jax.random.PRNGKey(0)
    kx, k1, k2, k3, k4 = jax.random.split(key, 5)

    x = jax.random.normal(kx, (B, C, L), dtype=jnp.float32)

    # Deterministic synthetic parameters (PyTorch Linear stores (out, in)).
    bound1 = 1.0 / np.sqrt(C)
    bound2 = 1.0 / np.sqrt(H)
    w1 = jax.random.uniform(k1, (H, C), minval=-bound1, maxval=bound1, dtype=jnp.float32)
    b1 = jax.random.uniform(k2, (H,), minval=-bound1, maxval=bound1, dtype=jnp.float32)
    w2 = jax.random.uniform(k3, (C, H), minval=-bound2, maxval=bound2, dtype=jnp.float32)
    b2 = jax.random.uniform(k4, (C,), minval=-bound2, maxval=bound2, dtype=jnp.float32)

    out = jax.block_until_ready(se_layer(x, w1, b1, w2, b2))
    ref = jax.block_until_ready(se_layer_reference(x, w1, b1, w2, b2))

    assert out.shape == (B, C, L)
    assert np.allclose(np.asarray(out), np.asarray(ref), atol=2e-5, rtol=2e-5)

    print("KERNEL_OK")
</pallas_src>

<mosaic_0001>
module attributes {stable_mosaic.version = 11 : i64} {
  func.func @_se_kernel(%arg0: i32, %arg1: memref<8x2048xf32, #tpu.memory_space<vmem>>, %arg2: memref<2x2048xf32, #tpu.memory_space<vmem>>, %arg3: memref<1x2xf32, #tpu.memory_space<vmem>>, %arg4: memref<2x2048xf32, #tpu.memory_space<vmem>>, %arg5: memref<1x2048xf32, #tpu.memory_space<vmem>>, %arg6: memref<8x2048xf32, #tpu.memory_space<vmem>>) attributes {dimension_semantics = [#tpu.dimension_semantics<parallel>], iteration_bounds = array<i64: 1>, scalar_prefetch = 0 : i64, scratch_operands = 0 : i64, tpu.core_type = #tpu.core_type<tc>, window_params = [{transform_indices = @transform_0, window_bounds = array<i64: 8, 2048>}, {pipeline_mode = #tpu.pipeline_mode<synchronous>, transform_indices = @transform_1, window_bounds = array<i64: 2, 2048>}, {pipeline_mode = #tpu.pipeline_mode<synchronous>, transform_indices = @transform_2, window_bounds = array<i64: 1, 2>}, {pipeline_mode = #tpu.pipeline_mode<synchronous>, transform_indices = @transform_3, window_bounds = array<i64: 2, 2048>}, {pipeline_mode = #tpu.pipeline_mode<synchronous>, transform_indices = @transform_4, window_bounds = array<i64: 1, 2048>}, {transform_indices = @transform_5, window_bounds = array<i64: 8, 2048>}]} {
    %c0 = arith.constant 0 : index
    %c0_0 = arith.constant 0 : index
    %0 = vector.load %arg1[%c0, %c0_0] : memref<8x2048xf32, #tpu.memory_space<vmem>>, vector<8x2048xf32>
    %c0_1 = arith.constant 0 : index
    %c0_2 = arith.constant 0 : index
    %1 = vector.load %arg5[%c0_1, %c0_2] : memref<1x2048xf32, #tpu.memory_space<vmem>>, vector<1x2048xf32>
    %c0_3 = arith.constant 0 : index
    %c0_4 = arith.constant 0 : index
    %2 = vector.load %arg2[%c0_3, %c0_4] : memref<2x2048xf32, #tpu.memory_space<vmem>>, vector<1x2048xf32>
    %3 = vector.broadcast %2 : vector<1x2048xf32> to vector<8x2048xf32>
    %4 = arith.mulf %0, %3 : vector<8x2048xf32>
    %cst = arith.constant dense<0.000000e+00> : vector<8xf32>
    %5 = vector.multi_reduction <add>, %4, %cst [1] : vector<8x2048xf32> to vector<8xf32>
    %6 = vector.shape_cast %5 : vector<8xf32> to vector<8x1xf32>
    %c0_5 = arith.constant 0 : index
    %c0_6 = arith.constant 0 : index
    %7 = vector.load %arg3[%c0_5, %c0_6] : memref<1x2xf32, #tpu.memory_space<vmem>>, vector<1x1xf32>
    %8 = vector.broadcast %7 : vector<1x1xf32> to vector<8x1xf32>
    %9 = arith.addf %6, %8 : vector<8x1xf32>
    %cst_7 = arith.constant 0.000000e+00 : f32
    %10 = vector.broadcast %cst_7 : f32 to vector<8x1xf32>
    %11 = arith.maximumf %9, %10 : vector<8x1xf32>
    %c0_8 = arith.constant 0 : index
    %c0_9 = arith.constant 0 : index
    %12 = vector.load %arg4[%c0_8, %c0_9] : memref<2x2048xf32, #tpu.memory_space<vmem>>, vector<1x2048xf32>
    %13 = vector.broadcast %11 : vector<8x1xf32> to vector<8x2048xf32>
    %14 = vector.broadcast %12 : vector<1x2048xf32> to vector<8x2048xf32>
    %15 = arith.mulf %13, %14 : vector<8x2048xf32>
    %16 = vector.broadcast %1 : vector<1x2048xf32> to vector<8x2048xf32>
    %17 = arith.addf %16, %15 : vector<8x2048xf32>
    %c1 = arith.constant 1 : index
    %c0_10 = arith.constant 0 : index
    %18 = vector.load %arg2[%c1, %c0_10] : memref<2x2048xf32, #tpu.memory_space<vmem>>, vector<1x2048xf32>
    %19 = vector.broadcast %18 : vector<1x2048xf32> to vector<8x2048xf32>
    %20 = arith.mulf %0, %19 : vector<8x2048xf32>
    %cst_11 = arith.constant dense<0.000000e+00> : vector<8xf32>
    %21 = vector.multi_reduction <add>, %20, %cst_11 [1] : vector<8x2048xf32> to vector<8xf32>
    %22 = vector.shape_cast %21 : vector<8xf32> to vector<8x1xf32>
    %c0_12 = arith.constant 0 : index
    %c1_13 = arith.constant 1 : index
    %23 = vector.load %arg3[%c0_12, %c1_13] : memref<1x2xf32, #tpu.memory_space<vmem>>, vector<1x1xf32>
    %24 = vector.broadcast %23 : vector<1x1xf32> to vector<8x1xf32>
    %25 = arith.addf %22, %24 : vector<8x1xf32>
    %cst_14 = arith.constant 0.000000e+00 : f32
    %26 = vector.broadcast %cst_14 : f32 to vector<8x1xf32>
    %27 = arith.maximumf %25, %26 : vector<8x1xf32>
    %c1_15 = arith.constant 1 : index
    %c0_16 = arith.constant 0 : index
    %28 = vector.load %arg4[%c1_15, %c0_16] : memref<2x2048xf32, #tpu.memory_space<vmem>>, vector<1x2048xf32>
    %29 = vector.broadcast %27 : vector<8x1xf32> to vector<8x2048xf32>
    %30 = vector.broadcast %28 : vector<1x2048xf32> to vector<8x2048xf32>
    %31 = arith.mulf %29, %30 : vector<8x2048xf32>
    %32 = arith.addf %17, %31 : vector<8x2048xf32>
    %33 = arith.negf %32 : vector<8x2048xf32>
    %34 = math.exp %33 : vector<8x2048xf32>
    %cst_17 = arith.constant 1.000000e+00 : f32
    %35 = vector.broadcast %cst_17 : f32 to vector<8x2048xf32>
    %36 = arith.addf %35, %34 : vector<8x2048xf32>
    %37 = arith.divf %35, %36 : vector<8x2048xf32>
    %38 = arith.mulf %0, %37 : vector<8x2048xf32>
    %c0_18 = arith.constant 0 : index
    %c0_19 = arith.constant 0 : index
    %39 = vector.load %arg6[%c0_18, %c0_19] : memref<8x2048xf32, #tpu.memory_space<vmem>>, vector<8x2048xf32>
    tpu.vector_store %arg6[%c0_18, %c0_19], %38 {strides = array<i32>} : memref<8x2048xf32, #tpu.memory_space<vmem>>, vector<8x2048xf32>,
    return
  }
  func.func @transform_0(%arg0: i32) -> (i32, i32) {
    %c0_i32 = arith.constant 0 : i32
    %c0_i32_0 = arith.constant 0 : i32
    return %arg0, %c0_i32 : i32, i32
  }
  func.func @transform_1(%arg0: i32) -> (i32, i32) {
    %c0_i32 = arith.constant 0 : i32
    %c0_i32_0 = arith.constant 0 : i32
    %c0_i32_1 = arith.constant 0 : i32
    return %c0_i32, %c0_i32_0 : i32, i32
  }
  func.func @transform_2(%arg0: i32) -> (i32, i32) {
    %c0_i32 = arith.constant 0 : i32
    %c0_i32_0 = arith.constant 0 : i32
    %c0_i32_1 = arith.constant 0 : i32
    return %c0_i32, %c0_i32_0 : i32, i32
  }
  func.func @transform_3(%arg0: i32) -> (i32, i32) {
    %c0_i32 = arith.constant 0 : i32
    %c0_i32_0 = arith.constant 0 : i32
    %c0_i32_1 = arith.constant 0 : i32
    return %c0_i32, %c0_i32_0 : i32, i32
  }
  func.func @transform_4(%arg0: i32) -> (i32, i32) {
    %c0_i32 = arith.constant 0 : i32
    %c0_i32_0 = arith.constant 0 : i32
    %c0_i32_1 = arith.constant 0 : i32
    return %c0_i32, %c0_i32_0 : i32, i32
  }
  func.func @transform_5(%arg0: i32) -> (i32, i32) {
    %c0_i32 = arith.constant 0 : i32
    %c0_i32_0 = arith.constant 0 : i32
    return %arg0, %c0_i32 : i32, i32
  }
}

</mosaic_0001>

<llo_original>
// kernel: tpu_custom_call.1
$region0: #{tpu_custom_call.1}
  #allocation0 [shape = 'u32[]', space=smem, size = 0x4, offset = 0x4, fixed_abs, tag = 'smem constant byte address 0x4 - core index']
  #allocation1 [shape = 'u32[144,128]{1,0:T(1,128)}', space=vmem, size = 0x12000, scoped, tag = 'internal scratch']
  %s0 = inlined_call_operand.hbm [shape: f32[8,2048], index: 0, kind: input, shape index: {}]
  %s1 = inlined_call_operand.hbm [shape: f32[2,2048], index: 1, kind: input, shape index: {}]
  %s2 = inlined_call_operand.vmem [shape: f32[1,2], index: 2, kind: input, shape index: {}]
  %s3 = inlined_call_operand.hbm [shape: f32[2,2048], index: 3, kind: input, shape index: {}]
  %s4 = inlined_call_operand.hbm [shape: f32[1,2048], index: 4, kind: input, shape index: {}]
  %s5 = inlined_call_operand.hbm [shape: f32[8,2048], index: 5, kind: output, shape index: {}]
  %s6 = sld [smem:[#allocation0]]
  $region46: #{tpu_custom_call.1} parent=0
    _
  %s8 = ssub.s32 1, %s6
  %s9 = scalar_select 0, %s8, %s6
  $region1: #{tpu_custom_call.1} parent=0
    #allocation2 [shape = 'u8[65536]{0}', space=vmem, size = 0x10000, scoped, tag = 'input window, operand 0, single buffered']
    #allocation3 [shape = 's32[1]{0}', space=sflag, size = 0x4, scoped, tag = 'scoped memory for tpu_custom_call.1']
    #allocation4 [shape = 's32[1]{0}', space=sflag, size = 0x4, scoped, tag = 'scoped memory for tpu_custom_call.1']
    #allocation5 [shape = 'u8[16384]{0}', space=vmem, size = 0x4000, scoped, tag = 'input window, operand 1, single buffered']
    #allocation6 [shape = 's32[1]{0}', space=sflag, size = 0x4, scoped, tag = 'scoped memory for tpu_custom_call.1']
    #allocation7 [shape = 'u8[16384]{0}', space=vmem, size = 0x4000, scoped, tag = 'input window, operand 3, single buffered']
    #allocation8 [shape = 'u8[8192]{0}', space=vmem, size = 0x2000, scoped, tag = 'input window, operand 4, single buffered']
    #allocation9 [shape = 's32[1]{0}', space=sflag, size = 0x4, scoped, tag = 'scoped memory for tpu_custom_call.1']
    #allocation10 [shape = 'u8[65536]{0}', space=vmem, size = 0x10000, scoped, tag = 'output window, operand 0, single buffered']
    %10 = vsyncpa [#allocation3], 0
    %11 = vsyncpa [#allocation6], 0
    %12 = vsyncpa [#allocation9], 0
    %13 = vsyncpa [#allocation4], 0
    // Predicated region
    $region2: #{tpu_custom_call.1} parent=1 // pred_check
      _
    $region3: #{tpu_custom_call.1} parent=1 // pred_check_branch
      %15 = sbr.rel (0) target = $region5
    $region4: #{tpu_custom_call.1} parent=1 // pred_region
      %s17 = ssub.s32 2048, 2048
      %18 = vsyncadd [#allocation3], %s17
      %s20 = sshll.u32 [#allocation2], 4
      %s21 = int_to_ptr.vmem [resolvable:$true] %s20
      %23 = dma.hbm_to_vmem [thread:$0]  %s0, 2048, %s21, [#allocation3]
    $region5: #{tpu_custom_call.1} parent=1 // pred_fallthru
      _
    // Predicated region
    $region6: #{tpu_custom_call.1} parent=1 // pred_check
      _
    $region7: #{tpu_custom_call.1} parent=1 // pred_check_branch
      %25 = sbr.rel (0) target = $region9
    $region8: #{tpu_custom_call.1} parent=1 // pred_region
      %s27 = ssub.s32 512, 512
      %28 = vsyncadd [#allocation6], %s27
      %s30 = sshll.u32 [#allocation5], 4
      %s31 = int_to_ptr.vmem [resolvable:$true] %s30
      %33 = dma.hbm_to_vmem [thread:$0]  %s1, 512, %s31, [#allocation6]
    $region9: #{tpu_custom_call.1} parent=1 // pred_fallthru
      _
    // Predicated region
    $region10: #{tpu_custom_call.1} parent=1 // pred_check
      _
    $region11: #{tpu_custom_call.1} parent=1 // pred_check_branch
      %35 = sbr.rel (0) target = $region13
    $region12: #{tpu_custom_call.1} parent=1 // pred_region
      _
    $region13: #{tpu_custom_call.1} parent=1 // pred_fallthru
      _
    // Predicated region
    $region14: #{tpu_custom_call.1} parent=1 // pred_check
      _
    $region15: #{tpu_custom_call.1} parent=1 // pred_check_branch
      %37 = sbr.rel (0) target = $region17
    $region16: #{tpu_custom_call.1} parent=1 // pred_region
      %s39 = ssub.s32 512, 512
      %40 = vsyncadd [#allocation6], %s39
      %s42 = sshll.u32 [#allocation7], 4
      %s43 = int_to_ptr.vmem [resolvable:$true] %s42
      %45 = dma.hbm_to_vmem [thread:$0]  %s3, 512, %s43, [#allocation6]
    $region17: #{tpu_custom_call.1} parent=1 // pred_fallthru
      _
    // Predicated region
    $region18: #{tpu_custom_call.1} parent=1 // pred_check
      _
    $region19: #{tpu_custom_call.1} parent=1 // pred_check_branch
      %47 = sbr.rel (0) target = $region21
    $region20: #{tpu_custom_call.1} parent=1 // pred_region
      %s49 = ssub.s32 256, 256
      %50 = vsyncadd [#allocation9], %s49
      %s52 = sshll.u32 [#allocation8], 4
      %s53 = int_to_ptr.vmem [resolvable:$true] %s52
      %55 = dma.hbm_to_vmem [thread:$0]  %s4, 256, %s53, [#allocation9]
    $region21: #{tpu_custom_call.1} parent=1 // pred_fallthru
      _
    // Predicated region
    $region22: #{tpu_custom_call.1} parent=1 // pred_check
      _
    $region23: #{tpu_custom_call.1} parent=1 // pred_check_branch
      %57 = sbr.rel (0) target = $region25
    $region24: #{tpu_custom_call.1} parent=1 // pred_region
      %58 = dma.done [#allocation3], 2048
    $region25: #{tpu_custom_call.1} parent=1 // pred_fallthru
      _
    // Predicated region
    $region26: #{tpu_custom_call.1} parent=1 // pred_check
      _
    $region27: #{tpu_custom_call.1} parent=1 // pred_check_branch
      %60 = sbr.rel (0) target = $region29
    $region28: #{tpu_custom_call.1} parent=1 // pred_region
      %61 = dma.done [#allocation6], 512
    $region29: #{tpu_custom_call.1} parent=1 // pred_fallthru
      _
    // Predicated region
    $region30: #{tpu_custom_call.1} parent=1 // pred_check
      _
    $region31: #{tpu_custom_call.1} parent=1 // pred_check_branch
      %63 = sbr.rel (0) target = $region33
    $region32: #{tpu_custom_call.1} parent=1 // pred_region
      %64 = dma.done [#allocation6], 512
    $region33: #{tpu_custom_call.1} parent=1 // pred_fallthru
      _
    // Predicated region
    $region34: #{tpu_custom_call.1} parent=1 // pred_check
      _
    $region35: #{tpu_custom_call.1} parent=1 // pred_check_branch
      %66 = sbr.rel (0) target = $region37
    $region36: #{tpu_custom_call.1} parent=1 // pred_region
      %67 = dma.done [#allocation9], 256
    $region37: #{tpu_custom_call.1} parent=1 // pred_fallthru
      _
    %v68 = vld [vmem:[#allocation2] sm:$0xff]
    %v69 = vld [vmem:[#allocation2 + $0x8] sm:$0xff]
    %v70 = vld [vmem:[#allocation2 + $0x10] sm:$0xff]
    %v71 = vld [vmem:[#allocation2 + $0x18] sm:$0xff]
    %v72 = vld [vmem:[#allocation2 + $0x20] sm:$0xff]
    %v73 = vld [vmem:[#allocation2 + $0x28] sm:$0xff]
    %v74 = vld [vmem:[#allocation2 + $0x30] sm:$0xff]
    %v75 = vld [vmem:[#allocation2 + $0x38] sm:$0xff]
    %v76 = vld [vmem:[#allocation2 + $0x40] sm:$0xff]
    %v77 = vld [vmem:[#allocation2 + $0x48] sm:$0xff]
    %v78 = vld [vmem:[#allocation2 + $0x50] sm:$0xff]
    %v79 = vld [vmem:[#allocation2 + $0x58] sm:$0xff]
    %v80 = vld [vmem:[#allocation2 + $0x60] sm:$0xff]
    %v81 = vld [vmem:[#allocation2 + $0x68] sm:$0xff]
    %v82 = vld [vmem:[#allocation2 + $0x70] sm:$0xff]
    %v83 = vld [vmem:[#allocation2 + $0x78] sm:$0xff]
    %v84 = vld [vmem:[#allocation8] sm:$0xff]
    %v85 = vld [vmem:[#allocation8 + $0x8] sm:$0xff]
    %v86 = vld [vmem:[#allocation5] ss:$2 sm:$0xff]
    %s87 = scalar_lea.vmem [#allocation5], 16
    %v88 = vld [vmem:[%s87] ss:$2 sm:$0xff]
    %v91 = vlaneseq
    %v92 = vshrl.u32 %v91, 7
    %v93 = vsub.s32 0, %v92
    %v94 = vrot.slane %v86, %v93
    %v95 = vlaneseq
    %v96 = vshrl.u32 %v95, 7
    %v97 = vsub.s32 1, %v96
    %v98 = vrot.slane %v86, %v97
    %v99 = vlaneseq
    %v100 = vshrl.u32 %v99, 7
    %v101 = vsub.s32 2, %v100
    %v102 = vrot.slane %v86, %v101
    %v103 = vlaneseq
    %v104 = vshrl.u32 %v103, 7
    %v105 = vsub.s32 3, %v104
    %v106 = vrot.slane %v86, %v105
    %v107 = vlaneseq
    %v108 = vshrl.u32 %v107, 7
    %v109 = vsub.s32 4, %v108
    %v110 = vrot.slane %v86, %v109
    %v111 = vlaneseq
    %v112 = vshrl.u32 %v111, 7
    %v113 = vsub.s32 5, %v112
    %v114 = vrot.slane %v86, %v113
    %v115 = vlaneseq
    %v116 = vshrl.u32 %v115, 7
    %v117 = vsub.s32 6, %v116
    %v118 = vrot.slane %v86, %v117
    %v119 = vlaneseq
    %v120 = vshrl.u32 %v119, 7
    %v121 = vsub.s32 7, %v120
    %v122 = vrot.slane %v86, %v121
    %v123 = vlaneseq
    %v124 = vshrl.u32 %v123, 7
    %v125 = vsub.s32 0, %v124
    %v126 = vrot.slane %v88, %v125
    %v127 = vlaneseq
    %v128 = vshrl.u32 %v127, 7
    %v129 = vsub.s32 1, %v128
    %v130 = vrot.slane %v88, %v129
    %v131 = vlaneseq
    %v132 = vshrl.u32 %v131, 7
    %v133 = vsub.s32 2, %v132
    %v134 = vrot.slane %v88, %v133
    %v135 = vlaneseq
    %v136 = vshrl.u32 %v135, 7
    %v137 = vsub.s32 3, %v136
    %v138 = vrot.slane %v88, %v137
    %v139 = vlaneseq
    %v140 = vshrl.u32 %v139, 7
    %v141 = vsub.s32 4, %v140
    %v142 = vrot.slane %v88, %v141
    %v143 = vlaneseq
    %v144 = vshrl.u32 %v143, 7
    %v145 = vsub.s32 5, %v144
    %v146 = vrot.slane %v88, %v145
    %v147 = vlaneseq
    %v148 = vshrl.u32 %v147, 7
    %v149 = vsub.s32 6, %v148
    %v150 = vrot.slane %v88, %v149
    %v151 = vlaneseq
    %v152 = vshrl.u32 %v151, 7
    %v153 = vsub.s32 7, %v152
    %v154 = vrot.slane %v88, %v153
    %v171 = vmul.f32 %v68, %v94
    %v172 = vmul.f32 %v69, %v98
    %v173 = vmul.f32 %v70, %v102
    %v174 = vmul.f32 %v71, %v106
    %v175 = vmul.f32 %v72, %v110
    %v176 = vmul.f32 %v73, %v114
    %v177 = vmul.f32 %v74, %v118
    %v178 = vmul.f32 %v75, %v122
    %v179 = vmul.f32 %v76, %v126
    %v180 = vmul.f32 %v77, %v130
    %v181 = vmul.f32 %v78, %v134
    %v182 = vmul.f32 %v79, %v138
    %v183 = vmul.f32 %v80, %v142
    %v184 = vmul.f32 %v81, %v146
    %v185 = vmul.f32 %v82, %v150
    %v186 = vmul.f32 %v83, %v154
    %v187 = vadd.f32 %v171, %v172
    %v188 = vadd.f32 %v187, %v173
    %v189 = vadd.f32 %v188, %v174
    %v190 = vadd.f32 %v189, %v175
    %v191 = vadd.f32 %v190, %v176
    %v192 = vadd.f32 %v191, %v177
    %v193 = vadd.f32 %v192, %v178
    %v194 = vadd.f32 %v193, %v179
    %v195 = vadd.f32 %v194, %v180
    %v196 = vadd.f32 %v195, %v181
    %v197 = vadd.f32 %v196, %v182
    %v198 = vadd.f32 %v197, %v183
    %v199 = vadd.f32 %v198, %v184
    %v200 = vadd.f32 %v199, %v185
    %v201 = vadd.f32 %v200, %v186
    %202 = vadd.xlane.f32.xlu0 %v201
    %v203 = vpop.xlane.xlu0 %202
    %v204 = vld [vmem:[%s2] sm:$0x1]
    %v206 = vlaneseq
    %v207 = vshrl.u32 %v206, 7
    %v208 = vsub.s32 0, %v207
    %v209 = vrot.slane %v204, %v208
    %v211 = vadd.f32 %v203, %v209
    %v212 = vmax.f32 %v211, 0.0
    %v213 = vld [vmem:[#allocation7] ss:$2 sm:$0xff]
    %s214 = scalar_lea.vmem [#allocation7], 16
    %v215 = vld [vmem:[%s214] ss:$2 sm:$0xff]
    %217 = vset.pattern.permute.xlu0 0
    %218 = vperm.xlu0 %217, %v212
    %v219 = vpop.permute.xlu0 %218
    %v223 = vlaneseq
    %v224 = vshrl.u32 %v223, 7
    %v225 = vsub.s32 0, %v224
    %v226 = vrot.slane %v213, %v225
    %v227 = vlaneseq
    %v228 = vshrl.u32 %v227, 7
    %v229 = vsub.s32 1, %v228
    %v230 = vrot.slane %v213, %v229
    %v231 = vlaneseq
    %v232 = vshrl.u32 %v231, 7
    %v233 = vsub.s32 2, %v232
    %v234 = vrot.slane %v213, %v233
    %v235 = vlaneseq
    %v236 = vshrl.u32 %v235, 7
    %v237 = vsub.s32 3, %v236
    %v238 = vrot.slane %v213, %v237
    %v239 = vlaneseq
    %v240 = vshrl.u32 %v239, 7
    %v241 = vsub.s32 4, %v240
    %v242 = vrot.slane %v213, %v241
    %v243 = vlaneseq
    %v244 = vshrl.u32 %v243, 7
    %v245 = vsub.s32 5, %v244
    %v246 = vrot.slane %v213, %v245
    %v247 = vlaneseq
    %v248 = vshrl.u32 %v247, 7
    %v249 = vsub.s32 6, %v248
    %v250 = vrot.slane %v213, %v249
    %v251 = vlaneseq
    %v252 = vshrl.u32 %v251, 7
    %v253 = vsub.s32 7, %v252
    %v254 = vrot.slane %v213, %v253
    %v255 = vlaneseq
    %v256 = vshrl.u32 %v255, 7
    %v257 = vsub.s32 0, %v256
    %v258 = vrot.slane %v215, %v257
    %v259 = vlaneseq
    %v260 = vshrl.u32 %v259, 7
    %v261 = vsub.s32 1, %v260
    %v262 = vrot.slane %v215, %v261
    %v263 = vlaneseq
    %v264 = vshrl.u32 %v263, 7
    %v265 = vsub.s32 2, %v264
    %v266 = vrot.slane %v215, %v265
    %v267 = vlaneseq
    %v268 = vshrl.u32 %v267, 7
    %v269 = vsub.s32 3, %v268
    %v270 = vrot.slane %v215, %v269
    %v271 = vlaneseq
    %v272 = vshrl.u32 %v271, 7
    %v273 = vsub.s32 4, %v272
    %v274 = vrot.slane %v215, %v273
    %v275 = vlaneseq
    %v276 = vshrl.u32 %v275, 7
    %v277 = vsub.s32 5, %v276
    %v278 = vrot.slane %v215, %v277
    %v279 = vlaneseq
    %v280 = vshrl.u32 %v279, 7
    %v281 = vsub.s32 6, %v280
    %v282 = vrot.slane %v215, %v281
    %v283 = vlaneseq
    %v284 = vshrl.u32 %v283, 7
    %v285 = vsub.s32 7, %v284
    %v286 = vrot.slane %v215, %v285
    %v303 = vmul.f32 %v219, %v226
    %v304 = vmul.f32 %v219, %v230
    %v305 = vmul.f32 %v219, %v234
    %v306 = vmul.f32 %v219, %v238
    %v307 = vmul.f32 %v219, %v242
    %v308 = vmul.f32 %v219, %v246
    %v309 = vmul.f32 %v219, %v250
    %v310 = vmul.f32 %v219, %v254
    %v311 = vmul.f32 %v219, %v258
    %v312 = vmul.f32 %v219, %v262
    %v313 = vmul.f32 %v219, %v266
    %v314 = vmul.f32 %v219, %v270
    %v315 = vmul.f32 %v219, %v274
    %v316 = vmul.f32 %v219, %v278
    %v317 = vmul.f32 %v219, %v282
    %v318 = vmul.f32 %v219, %v286
    %v321 = vlaneseq
    %v322 = vshrl.u32 %v321, 7
    %v323 = vsub.s32 0, %v322
    %v324 = vrot.slane %v84, %v323
    %v325 = vlaneseq
    %v326 = vshrl.u32 %v325, 7
    %v327 = vsub.s32 1, %v326
    %v328 = vrot.slane %v84, %v327
    %v329 = vlaneseq
    %v330 = vshrl.u32 %v329, 7
    %v331 = vsub.s32 2, %v330
    %v332 = vrot.slane %v84, %v331
    %v333 = vlaneseq
    %v334 = vshrl.u32 %v333, 7
    %v335 = vsub.s32 3, %v334
    %v336 = vrot.slane %v84, %v335
    %v337 = vlaneseq
    %v338 = vshrl.u32 %v337, 7
    %v339 = vsub.s32 4, %v338
    %v340 = vrot.slane %v84, %v339
    %v341 = vlaneseq
    %v342 = vshrl.u32 %v341, 7
    %v343 = vsub.s32 5, %v342
    %v344 = vrot.slane %v84, %v343
    %v345 = vlaneseq
    %v346 = vshrl.u32 %v345, 7
    %v347 = vsub.s32 6, %v346
    %v348 = vrot.slane %v84, %v347
    %v349 = vlaneseq
    %v350 = vshrl.u32 %v349, 7
    %v351 = vsub.s32 7, %v350
    %v352 = vrot.slane %v84, %v351
    %v353 = vlaneseq
    %v354 = vshrl.u32 %v353, 7
    %v355 = vsub.s32 0, %v354
    %v356 = vrot.slane %v85, %v355
    %v357 = vlaneseq
    %v358 = vshrl.u32 %v357, 7
    %v359 = vsub.s32 1, %v358
    %v360 = vrot.slane %v85, %v359
    %v361 = vlaneseq
    %v362 = vshrl.u32 %v361, 7
    %v363 = vsub.s32 2, %v362
    %v364 = vrot.slane %v85, %v363
    %v365 = vlaneseq
    %v366 = vshrl.u32 %v365, 7
    %v367 = vsub.s32 3, %v366
    %v368 = vrot.slane %v85, %v367
    %v369 = vlaneseq
    %v370 = vshrl.u32 %v369, 7
    %v371 = vsub.s32 4, %v370
    %v372 = vrot.slane %v85, %v371
    %v373 = vlaneseq
    %v374 = vshrl.u32 %v373, 7
    %v375 = vsub.s32 5, %v374
    %v376 = vrot.slane %v85, %v375
    %v377 = vlaneseq
    %v378 = vshrl.u32 %v377, 7
    %v379 = vsub.s32 6, %v378
    %v380 = vrot.slane %v85, %v379
    %v381 = vlaneseq
    %v382 = vshrl.u32 %v381, 7
    %v383 = vsub.s32 7, %v382
    %v384 = vrot.slane %v85, %v383
    %v401 = vadd.f32 %v324, %v303
    %v402 = vadd.f32 %v328, %v304
    %v403 = vadd.f32 %v332, %v305
    %v404 = vadd.f32 %v336, %v306
    %v405 = vadd.f32 %v340, %v307
    %v406 = vadd.f32 %v344, %v308
    %v407 = vadd.f32 %v348, %v309
    %v408 = vadd.f32 %v352, %v310
    %v409 = vadd.f32 %v356, %v311
    %v410 = vadd.f32 %v360, %v312
    %v411 = vadd.f32 %v364, %v313
    %v412 = vadd.f32 %v368, %v314
    %v413 = vadd.f32 %v372, %v315
    %v414 = vadd.f32 %v376, %v316
    %v415 = vadd.f32 %v380, %v317
    %v416 = vadd.f32 %v384, %v318
    %s417 = scalar_lea.vmem [#allocation5], 1
    %v418 = vld [vmem:[%s417] ss:$2 sm:$0xff]
    %s419 = scalar_lea.vmem [#allocation5], 17
    %v420 = vld [vmem:[%s419] ss:$2 sm:$0xff]
    %v423 = vlaneseq
    %v424 = vshrl.u32 %v423, 7
    %v425 = vsub.s32 0, %v424
    %v426 = vrot.slane %v418, %v425
    %v427 = vlaneseq
    %v428 = vshrl.u32 %v427, 7
    %v429 = vsub.s32 1, %v428
    %v430 = vrot.slane %v418, %v429
    %v431 = vlaneseq
    %v432 = vshrl.u32 %v431, 7
    %v433 = vsub.s32 2, %v432
    %v434 = vrot.slane %v418, %v433
    %v435 = vlaneseq
    %v436 = vshrl.u32 %v435, 7
    %v437 = vsub.s32 3, %v436
    %v438 = vrot.slane %v418, %v437
    %v439 = vlaneseq
    %v440 = vshrl.u32 %v439, 7
    %v441 = vsub.s32 4, %v440
    %v442 = vrot.slane %v418, %v441
    %v443 = vlaneseq
    %v444 = vshrl.u32 %v443, 7
    %v445 = vsub.s32 5, %v444
    %v446 = vrot.slane %v418, %v445
    %v447 = vlaneseq
    %v448 = vshrl.u32 %v447, 7
    %v449 = vsub.s32 6, %v448
    %v450 = vrot.slane %v418, %v449
    %v451 = vlaneseq
    %v452 = vshrl.u32 %v451, 7
    %v453 = vsub.s32 7, %v452
    %v454 = vrot.slane %v418, %v453
    %v455 = vlaneseq
    %v456 = vshrl.u32 %v455, 7
    %v457 = vsub.s32 0, %v456
    %v458 = vrot.slane %v420, %v457
    %v459 = vlaneseq
    %v460 = vshrl.u32 %v459, 7
    %v461 = vsub.s32 1, %v460
    %v462 = vrot.slane %v420, %v461
    %v463 = vlaneseq
    %v464 = vshrl.u32 %v463, 7
    %v465 = vsub.s32 2, %v464
    %v466 = vrot.slane %v420, %v465
    %v467 = vlaneseq
    %v468 = vshrl.u32 %v467, 7
    %v469 = vsub.s32 3, %v468
    %v470 = vrot.slane %v420, %v469
    %v471 = vlaneseq
    %v472 = vshrl.u32 %v471, 7
    %v473 = vsub.s32 4, %v472
    %v474 = vrot.slane %v420, %v473
    %v475 = vlaneseq
    %v476 = vshrl.u32 %v475, 7
    %v477 = vsub.s32 5, %v476
    %v478 = vrot.slane %v420, %v477
    %v479 = vlaneseq
    %v480 = vshrl.u32 %v479, 7
    %v481 = vsub.s32 6, %v480
    %v482 = vrot.slane %v420, %v481
    %v483 = vlaneseq
    %v484 = vshrl.u32 %v483, 7
    %v485 = vsub.s32 7, %v484
    %v486 = vrot.slane %v420, %v485
    %v503 = vmul.f32 %v68, %v426
    %v504 = vmul.f32 %v69, %v430
    %v505 = vmul.f32 %v70, %v434
    %v506 = vmul.f32 %v71, %v438
    %v507 = vmul.f32 %v72, %v442
    %v508 = vmul.f32 %v73, %v446
    %v509 = vmul.f32 %v74, %v450
    %v510 = vmul.f32 %v75, %v454
    %v511 = vmul.f32 %v76, %v458
    %v512 = vmul.f32 %v77, %v462
    %v513 = vmul.f32 %v78, %v466
    %v514 = vmul.f32 %v79, %v470
    %v515 = vmul.f32 %v80, %v474
    %v516 = vmul.f32 %v81, %v478
    %v517 = vmul.f32 %v82, %v482
    %v518 = vmul.f32 %v83, %v486
    %v519 = vadd.f32 %v503, %v504
    %v520 = vadd.f32 %v519, %v505
    %v521 = vadd.f32 %v520, %v506
    %v522 = vadd.f32 %v521, %v507
    %v523 = vadd.f32 %v522, %v508
    %v524 = vadd.f32 %v523, %v509
    %v525 = vadd.f32 %v524, %v510
    %v526 = vadd.f32 %v525, %v511
    %v527 = vadd.f32 %v526, %v512
    %v528 = vadd.f32 %v527, %v513
    %v529 = vadd.f32 %v528, %v514
    %v530 = vadd.f32 %v529, %v515
    %v531 = vadd.f32 %v530, %v516
    %v532 = vadd.f32 %v531, %v517
    %v533 = vadd.f32 %v532, %v518
    %534 = vadd.xlane.f32.xlu0 %v533
    %v535 = vpop.xlane.xlu0 %534
    %v536 = vadd.f32 %v535, %v209
    %v537 = vmax.f32 %v536, 0.0
    %s538 = scalar_lea.vmem [#allocation7], 1
    %v539 = vld [vmem:[%s538] ss:$2 sm:$0xff]
    %s540 = scalar_lea.vmem [#allocation7], 17
    %v541 = vld [vmem:[%s540] ss:$2 sm:$0xff]
    %543 = vset.pattern.permute.xlu0 1
    %544 = vperm.xlu0 %543, %v537
    %v545 = vpop.permute.xlu0 %544
    %v549 = vlaneseq
    %v550 = vshrl.u32 %v549, 7
    %v551 = vsub.s32 0, %v550
    %v552 = vrot.slane %v539, %v551
    %v553 = vlaneseq
    %v554 = vshrl.u32 %v553, 7
    %v555 = vsub.s32 1, %v554
    %v556 = vrot.slane %v539, %v555
    %v557 = vlaneseq
    %v558 = vshrl.u32 %v557, 7
    %v559 = vsub.s32 2, %v558
    %v560 = vrot.slane %v539, %v559
    %v561 = vlaneseq
    %v562 = vshrl.u32 %v561, 7
    %v563 = vsub.s32 3, %v562
    %v564 = vrot.slane %v539, %v563
    %v565 = vlaneseq
    %v566 = vshrl.u32 %v565, 7
    %v567 = vsub.s32 4, %v566
    %v568 = vrot.slane %v539, %v567
    %v569 = vlaneseq
    %v570 = vshrl.u32 %v569, 7
    %v571 = vsub.s32 5, %v570
    %v572 = vrot.slane %v539, %v571
    %v573 = vlaneseq
    %v574 = vshrl.u32 %v573, 7
    %v575 = vsub.s32 6, %v574
    %v576 = vrot.slane %v539, %v575
    %v577 = vlaneseq
    %v578 = vshrl.u32 %v577, 7
    %v579 = vsub.s32 7, %v578
    %v580 = vrot.slane %v539, %v579
    %v581 = vlaneseq
    %v582 = vshrl.u32 %v581, 7
    %v583 = vsub.s32 0, %v582
    %v584 = vrot.slane %v541, %v583
    %v585 = vlaneseq
    %v586 = vshrl.u32 %v585, 7
    %v587 = vsub.s32 1, %v586
    %v588 = vrot.slane %v541, %v587
    %v589 = vlaneseq
    %v590 = vshrl.u32 %v589, 7
    %v591 = vsub.s32 2, %v590
    %v592 = vrot.slane %v541, %v591
    %v593 = vlaneseq
    %v594 = vshrl.u32 %v593, 7
    %v595 = vsub.s32 3, %v594
    %v596 = vrot.slane %v541, %v595
    %v597 = vlaneseq
    %v598 = vshrl.u32 %v597, 7
    %v599 = vsub.s32 4, %v598
    %v600 = vrot.slane %v541, %v599
    %v601 = vlaneseq
    %v602 = vshrl.u32 %v601, 7
    %v603 = vsub.s32 5, %v602
    %v604 = vrot.slane %v541, %v603
    %v605 = vlaneseq
    %v606 = vshrl.u32 %v605, 7
    %v607 = vsub.s32 6, %v606
    %v608 = vrot.slane %v541, %v607
    %v609 = vlaneseq
    %v610 = vshrl.u32 %v609, 7
    %v611 = vsub.s32 7, %v610
    %v612 = vrot.slane %v541, %v611
    %v629 = vmul.f32 %v545, %v552
    %v630 = vmul.f32 %v545, %v556
    %v631 = vmul.f32 %v545, %v560
    %v632 = vmul.f32 %v545, %v564
    %v633 = vmul.f32 %v545, %v568
    %v634 = vmul.f32 %v545, %v572
    %v635 = vmul.f32 %v545, %v576
    %v636 = vmul.f32 %v545, %v580
    %v637 = vmul.f32 %v545, %v584
    %v638 = vmul.f32 %v545, %v588
    %v639 = vmul.f32 %v545, %v592
    %v640 = vmul.f32 %v545, %v596
    %v641 = vmul.f32 %v545, %v600
    %v642 = vmul.f32 %v545, %v604
    %v643 = vmul.f32 %v545, %v608
    %v644 = vmul.f32 %v545, %v612
    %v645 = vadd.f32 %v401, %v629
    %v646 = vadd.f32 %v402, %v630
    %v647 = vadd.f32 %v403, %v631
    %v648 = vadd.f32 %v404, %v632
    %v649 = vadd.f32 %v405, %v633
    %v650 = vadd.f32 %v406, %v634
    %v651 = vadd.f32 %v407, %v635
    %v652 = vadd.f32 %v408, %v636
    %v653 = vadd.f32 %v409, %v637
    %v654 = vadd.f32 %v410, %v638
    %v655 = vadd.f32 %v411, %v639
    %v656 = vadd.f32 %v412, %v640
    %v657 = vadd.f32 %v413, %v641
    %v658 = vadd.f32 %v414, %v642
    %v659 = vadd.f32 %v415, %v643
    %v660 = vadd.f32 %v416, %v644
    %v661 = vxor.u32 %v645, 2147483648
    %v662 = vxor.u32 %v646, 2147483648
    %v663 = vxor.u32 %v647, 2147483648
    %v664 = vxor.u32 %v648, 2147483648
    %v665 = vxor.u32 %v649, 2147483648
    %v666 = vxor.u32 %v650, 2147483648
    %v667 = vxor.u32 %v651, 2147483648
    %v668 = vxor.u32 %v652, 2147483648
    %v669 = vxor.u32 %v653, 2147483648
    %v670 = vxor.u32 %v654, 2147483648
    %v671 = vxor.u32 %v655, 2147483648
    %v672 = vxor.u32 %v656, 2147483648
    %v673 = vxor.u32 %v657, 2147483648
    %v674 = vxor.u32 %v658, 2147483648
    %v675 = vxor.u32 %v659, 2147483648
    %v676 = vxor.u32 %v660, 2147483648
    %v677 = vmul.f32 %v661, 1.442695
    %v678 = vpow.pop %v677
    %v679 = vmul.f32 %v662, 1.442695
    %v680 = vpow.pop %v679
    %v681 = vmul.f32 %v663, 1.442695
    %v682 = vpow.pop %v681
    %v683 = vmul.f32 %v664, 1.442695
    %v684 = vpow.pop %v683
    %v685 = vmul.f32 %v665, 1.442695
    %v686 = vpow.pop %v685
    %v687 = vmul.f32 %v666, 1.442695
    %v688 = vpow.pop %v687
    %v689 = vmul.f32 %v667, 1.442695
    %v690 = vpow.pop %v689
    %v691 = vmul.f32 %v668, 1.442695
    %v692 = vpow.pop %v691
    %v693 = vmul.f32 %v669, 1.442695
    %v694 = vpow.pop %v693
    %v695 = vmul.f32 %v670, 1.442695
    %v696 = vpow.pop %v695
    %v697 = vmul.f32 %v671, 1.442695
    %v698 = vpow.pop %v697
    %v699 = vmul.f32 %v672, 1.442695
    %v700 = vpow.pop %v699
    %v701 = vmul.f32 %v673, 1.442695
    %v702 = vpow.pop %v701
    %v703 = vmul.f32 %v674, 1.442695
    %v704 = vpow.pop %v703
    %v705 = vmul.f32 %v675, 1.442695
    %v706 = vpow.pop %v705
    %v707 = vmul.f32 %v676, 1.442695
    %v708 = vpow.pop %v707
    %v709 = vadd.f32 %v678, 1.0
    %v710 = vadd.f32 %v680, 1.0
    %v711 = vadd.f32 %v682, 1.0
    %v712 = vadd.f32 %v684, 1.0
    %v713 = vadd.f32 %v686, 1.0
    %v714 = vadd.f32 %v688, 1.0
    %v715 = vadd.f32 %v690, 1.0
    %v716 = vadd.f32 %v692, 1.0
    %v717 = vadd.f32 %v694, 1.0
    %v718 = vadd.f32 %v696, 1.0
    %v719 = vadd.f32 %v698, 1.0
    %v720 = vadd.f32 %v700, 1.0
    %v721 = vadd.f32 %v702, 1.0
    %v722 = vadd.f32 %v704, 1.0
    %v723 = vadd.f32 %v706, 1.0
    %v724 = vadd.f32 %v708, 1.0
    %v725 = vrcp.pop %v709
    %v726 = vmul.f32 1.0, %v725
    %v727 = vrcp.pop %v710
    %v728 = vmul.f32 1.0, %v727
    %v729 = vrcp.pop %v711
    %v730 = vmul.f32 1.0, %v729
    %v731 = vrcp.pop %v712
    %v732 = vmul.f32 1.0, %v731
    %v733 = vrcp.pop %v713
    %v734 = vmul.f32 1.0, %v733
    %v735 = vrcp.pop %v714
    %v736 = vmul.f32 1.0, %v735
    %v737 = vrcp.pop %v715
    %v738 = vmul.f32 1.0, %v737
    %v739 = vrcp.pop %v716
    %v740 = vmul.f32 1.0, %v739
    %v741 = vrcp.pop %v717
    %v742 = vmul.f32 1.0, %v741
    %v743 = vrcp.pop %v718
    %v744 = vmul.f32 1.0, %v743
    %v745 = vrcp.pop %v719
    %v746 = vmul.f32 1.0, %v745
    %v747 = vrcp.pop %v720
    %v748 = vmul.f32 1.0, %v747
    %v749 = vrcp.pop %v721
    %v750 = vmul.f32 1.0, %v749
    %v751 = vrcp.pop %v722
    %v752 = vmul.f32 1.0, %v751
    %v753 = vrcp.pop %v723
    %v754 = vmul.f32 1.0, %v753
    %v755 = vrcp.pop %v724
    %v756 = vmul.f32 1.0, %v755
    %v757 = vmul.f32 %v68, %v726
    %v758 = vmul.f32 %v69, %v728
    %v759 = vmul.f32 %v70, %v730
    %v760 = vmul.f32 %v71, %v732
    %v761 = vmul.f32 %v72, %v734
    %v762 = vmul.f32 %v73, %v736
    %v763 = vmul.f32 %v74, %v738
    %v764 = vmul.f32 %v75, %v740
    %v765 = vmul.f32 %v76, %v742
    %v766 = vmul.f32 %v77, %v744
    %v767 = vmul.f32 %v78, %v746
    %v768 = vmul.f32 %v79, %v748
    %v769 = vmul.f32 %v80, %v750
    %v770 = vmul.f32 %v81, %v752
    %v771 = vmul.f32 %v82, %v754
    %v772 = vmul.f32 %v83, %v756
    %773 = vst [vmem:[#allocation10] sm:$0xff] %v757
    %774 = vst [vmem:[#allocation10 + $0x8] sm:$0xff] %v758
    %775 = vst [vmem:[#allocation10 + $0x10] sm:$0xff] %v759
    %776 = vst [vmem:[#allocation10 + $0x18] sm:$0xff] %v760
    %777 = vst [vmem:[#allocation10 + $0x20] sm:$0xff] %v761
    %778 = vst [vmem:[#allocation10 + $0x28] sm:$0xff] %v762
    %779 = vst [vmem:[#allocation10 + $0x30] sm:$0xff] %v763
    %780 = vst [vmem:[#allocation10 + $0x38] sm:$0xff] %v764
    %781 = vst [vmem:[#allocation10 + $0x40] sm:$0xff] %v765
    %782 = vst [vmem:[#allocation10 + $0x48] sm:$0xff] %v766
    %783 = vst [vmem:[#allocation10 + $0x50] sm:$0xff] %v767
    %784 = vst [vmem:[#allocation10 + $0x58] sm:$0xff] %v768
    %785 = vst [vmem:[#allocation10 + $0x60] sm:$0xff] %v769
    %786 = vst [vmem:[#allocation10 + $0x68] sm:$0xff] %v770
    %787 = vst [vmem:[#allocation10 + $0x70] sm:$0xff] %v771
    %788 = vst [vmem:[#allocation10 + $0x78] sm:$0xff] %v772
    // Predicated region
    $region38: #{tpu_custom_call.1} parent=1 // pred_check
      _
    $region39: #{tpu_custom_call.1} parent=1 // pred_check_branch
      %790 = sbr.rel (0) target = $region41
    $region40: #{tpu_custom_call.1} parent=1 // pred_region
      %s792 = ssub.s32 2048, 2048
      %793 = vsyncadd [#allocation4], %s792
      %s795 = sshll.u32 [#allocation10], 4
      %s796 = int_to_ptr.vmem [resolvable:$true] %s795
      %798 = dma.vmem_to_hbm [thread:$0]  %s796, 2048, %s5, [#allocation4]
    $region41: #{tpu_custom_call.1} parent=1 // pred_fallthru
      _
    // Predicated region
    $region42: #{tpu_custom_call.1} parent=1 // pred_check
      _
    $region43: #{tpu_custom_call.1} parent=1 // pred_check_branch
      %800 = sbr.rel (0) target = $region45
    $region44: #{tpu_custom_call.1} parent=1 // pred_region
      %801 = dma.done [#allocation4], 2048
    $region45: #{tpu_custom_call.1} parent=1 // pred_fallthru
      _
    %802 = vsyncpa [#allocation3], 1
    %803 = vsyncpa [#allocation6], 1
    %804 = vsyncpa [#allocation9], 1
    %805 = vsyncpa [#allocation4], 1

</llo_original>
